<compile_context>
chip_gen: v5e
topology: v5e:2x2
jax: 0.10.0
libtpu: 0.0.40
codegen_flags: <defaults>
</compile_context>

<pallas_src>
import jax
import jax.numpy as jnp
from jax import lax
from jax.experimental import pallas as pl
from jax.experimental.pallas import tpu as pltpu


def cross_attn_kernel(x_ref, d_ref, wq_ref, wkv_ref, o_ref, k_ref, v_ref):
    # x_ref:   (1, tq, E)   encoder hidden-state tile (one batch element, one q tile)
    # d_ref:   (1, Sk, E)   decoder hidden states (full Sk for this batch element)
    # wq_ref:  (E, E)       self_attn_weights.weight.T * (1/sqrt(E))
    # wkv_ref: (E, 2E)      cross_attn_weights.weight.T  (fused K|V)
    # o_ref:   (1, tq, E)
    # k_ref:   (Sk, E)  VMEM scratch (persists across q tiles of one batch elem)
    # v_ref:   (Sk, E)  VMEM scratch
    E = wq_ref.shape[1]

    # Fused K/V projection: compute once per batch element (first q tile),
    # reuse from VMEM scratch for every subsequent q tile of the same b.
    @pl.when(pl.program_id(1) == 0)
    def _():
        kv = jnp.dot(d_ref[0], wkv_ref[...],
                     preferred_element_type=jnp.float32)          # (Sk, 2E)
        k_ref[...] = kv[:, :E]
        v_ref[...] = kv[:, E:]

    # Q projection (1/sqrt(E) already folded into wq_ref by the wrapper).
    q = jnp.dot(x_ref[0], wq_ref[...],
                preferred_element_type=jnp.float32)                # (tq, E)

    # scores = q @ k^T, expressed as a contraction on the last dim of both
    # operands so Mosaic feeds the MXU directly (no materialized transpose).
    scores = lax.dot_general(
        q, k_ref[...],
        dimension_numbers=(((1,), (1,)), ((), ())),
        preferred_element_type=jnp.float32)                        # (tq, Sk)

    # Numerically-stable softmax over the key dimension.
    m = jnp.max(scores, axis=-1, keepdims=True)
    p = jnp.exp(scores - m)
    denom = jnp.sum(p, axis=-1, keepdims=True)
    # Exact reciprocal keeps 1e-5 accuracy; approx=True would move the divide
    # to the (otherwise idle) EUP slot at the cost of a looser tolerance.
    w = p * pl.reciprocal(denom, approx=False)                     # (tq, Sk)

    out = jnp.dot(w, v_ref[...], preferred_element_type=jnp.float32)  # (tq, E)
    o_ref[0] = out.astype(o_ref.dtype)


def _pick_q_tile(sq, target=256):
    """Largest aligned query tile <= target that divides Sq (falls back to full Sq)."""
    if sq <= target:
        return sq
    for t in (target, 128, 64, 32, 16, 8):
        if sq % t == 0:
            return t
    return sq


def cross_attention(hidden_states, decoder_hidden_states, wq, wkv, *, q_tile=256):
    """
    hidden_states:          [B, Sq, E]
    decoder_hidden_states:  [B, Sk, E]
    wq:  [E, E]   (PyTorch Linear weight layout, (out, in))
    wkv: [2E, E]  (PyTorch Linear weight layout, (out, in))
    returns: [B, Sq, E]
    """
    B, Sq, E = hidden_states.shape
    _, Sk, _ = decoder_hidden_states.shape
    assert wq.shape == (E, E) and wkv.shape == (2 * E, E)

    # Weight prep, once per call (ideally weights would be stored pre-transposed):
    #  - transpose to (in, out) so the kernel does plain row-major matmuls,
    #  - fuse K and V into a single (E, 2E) weight,
    #  - fold the 1/sqrt(E) attention scale into the Q weight.
    scale = 1.0 / jnp.sqrt(jnp.float32(E))
    wq_t = (wq.T * scale).astype(hidden_states.dtype)   # (E, E)
    wkv_t = wkv.T.astype(hidden_states.dtype)           # (E, 2E)

    tq = _pick_q_tile(Sq, q_tile)
    grid = (B, Sq // tq)

    # Note: for realistic model sizes E (and Sk) should be padded to multiples
    # of 128 and tq to multiples of 8 (f32) for lane-dense stores; the small
    # demo shapes work because every block equals the full array extent.
    return pl.pallas_call(
        cross_attn_kernel,
        out_shape=jax.ShapeDtypeStruct((B, Sq, E), hidden_states.dtype),
        grid_spec=pltpu.PrefetchScalarGridSpec(
            num_scalar_prefetch=0,
            grid=grid,
            in_specs=[
                pl.BlockSpec((1, tq, E), lambda b, qi: (b, qi, 0)),   # x (q-tiled)
                pl.BlockSpec((1, Sk, E), lambda b, qi: (b, 0, 0)),    # decoder states
                pl.BlockSpec((E, E), lambda b, qi: (0, 0)),           # wq (scaled)
                pl.BlockSpec((E, 2 * E), lambda b, qi: (0, 0)),       # fused wkv
            ],
            out_specs=pl.BlockSpec((1, tq, E), lambda b, qi: (b, qi, 0)),
            scratch_shapes=[
                pltpu.VMEM((Sk, E), jnp.float32),   # K, resident across q tiles
                pltpu.VMEM((Sk, E), jnp.float32),   # V, resident across q tiles
            ],
        ),
        compiler_params=pltpu.CompilerParams(
            # qi axis carries the K/V scratch dependency -> "arbitrary".
            dimension_semantics=("parallel", "arbitrary"),
            # Safe on all of v5e/v6e/v7x; re-derive from block sizes for big shapes.
            vmem_limit_bytes=32 * 1024 * 1024,
        ),
    )(hidden_states, decoder_hidden_states, wq_t, wkv_t)


def cross_attention_ref(hidden_states, decoder_hidden_states, wq, wkv):
    """Pure-JAX reference matching the PyTorch module semantics."""
    E = hidden_states.shape[-1]
    scale = 1.0 / jnp.sqrt(jnp.float32(E))
    q = hidden_states @ wq.T
    kv = decoder_hidden_states @ wkv.T
    k, v = kv[..., :E], kv[..., E:]
    scores = jnp.einsum("bqe,bke->bqk", q, k) * scale
    w = jax.nn.softmax(scores, axis=-1)
    return jnp.einsum("bqk,bke->bqe", w, v)


if __name__ == "__main__":
    B, Sq, Sk, E = 2, 8, 8, 32

    key = jax.random.PRNGKey(0)
    k1, k2, k3, k4 = jax.random.split(key, 4)

    hidden_states = jax.random.normal(k1, (B, Sq, E), dtype=jnp.float32)
    decoder_hidden_states = jax.random.normal(k2, (B, Sk, E), dtype=jnp.float32)

    # Deterministic parameter init mirroring nn.Linear weight shapes (out, in).
    bound = 1.0 / jnp.sqrt(jnp.float32(E))
    wq = jax.random.uniform(k3, (E, E), jnp.float32, -bound, bound)
    wkv = jax.random.uniform(k4, (2 * E, E), jnp.float32, -bound, bound)

    out = cross_attention(hidden_states, decoder_hidden_states, wq, wkv)
    out = jax.block_until_ready(out)

    ref = cross_attention_ref(hidden_states, decoder_hidden_states, wq, wkv)
    assert out.shape == (B, Sq, E)
    assert jnp.allclose(out, ref, atol=1e-5, rtol=1e-5), (
        f"max abs err = {jnp.max(jnp.abs(out - ref))}")

    print("KERNEL_OK")
</pallas_src>

<mosaic_0001>
module attributes {stable_mosaic.version = 11 : i64} {
  func.func @cross_attn_kernel(%arg0: i32, %arg1: i32, %arg2: memref<1x8x32xf32, #tpu.memory_space<vmem>>, %arg3: memref<1x8x32xf32, #tpu.memory_space<vmem>>, %arg4: memref<32x32xf32, #tpu.memory_space<vmem>>, %arg5: memref<32x64xf32, #tpu.memory_space<vmem>>, %arg6: memref<1x8x32xf32, #tpu.memory_space<vmem>>, %arg7: memref<8x32xf32, #tpu.memory_space<vmem>>, %arg8: memref<8x32xf32, #tpu.memory_space<vmem>>) attributes {dimension_semantics = [#tpu.dimension_semantics<parallel>, #tpu.dimension_semantics<arbitrary>], iteration_bounds = array<i64: 2, 1>, scalar_prefetch = 0 : i64, scratch_operands = 2 : i64, tpu.core_type = #tpu.core_type<tc>, window_params = [{transform_indices = @transform_0, window_bounds = array<i64: 1, 8, 32>}, {transform_indices = @transform_1, window_bounds = array<i64: 1, 8, 32>}, {pipeline_mode = #tpu.pipeline_mode<synchronous>, transform_indices = @transform_2, window_bounds = array<i64: 32, 32>}, {pipeline_mode = #tpu.pipeline_mode<synchronous>, transform_indices = @transform_3, window_bounds = array<i64: 32, 64>}, {transform_indices = @transform_4, window_bounds = array<i64: 1, 8, 32>}]} {
    %c0_i32 = arith.constant 0 : i32
    %0 = arith.cmpi eq, %arg1, %c0_i32 : i32
    %1 = arith.extui %0 : i1 to i32
    %c0_i32_0 = arith.constant 0 : i32
    %2 = arith.cmpi ne, %1, %c0_i32_0 : i32
    scf.if %2 {
      %c0_16 = arith.constant 0 : index
      %c0_17 = arith.constant 0 : index
      %c0_18 = arith.constant 0 : index
      %24 = vector.load %arg3[%c0_16, %c0_17, %c0_18] : memref<1x8x32xf32, #tpu.memory_space<vmem>>, vector<1x8x32xf32>
      %25 = vector.shape_cast %24 : vector<1x8x32xf32> to vector<8x32xf32>
      %c0_19 = arith.constant 0 : index
      %c0_20 = arith.constant 0 : index
      %26 = vector.load %arg5[%c0_19, %c0_20] : memref<32x64xf32, #tpu.memory_space<vmem>>, vector<32x64xf32>
      %cst_21 = arith.constant dense<0.000000e+00> : vector<8x64xf32>
      %27 = tpu.matmul %25, %26, %cst_21 {dimension_numbers = #tpu.dot_dimension_numbers<[1], [0], [0], [1], [0, 0, 1, 1], [], []>} : vector<8x32xf32>, vector<32x64xf32>, vector<8x64xf32> -> vector<8x64xf32>
      %28 = vector.extract_strided_slice %27 {offsets = [0, 0], sizes = [8, 32], strides = [1, 1]} : vector<8x64xf32> to vector<8x32xf32>
      %c0_22 = arith.constant 0 : index
      %c0_23 = arith.constant 0 : index
      %29 = vector.load %arg7[%c0_22, %c0_23] : memref<8x32xf32, #tpu.memory_space<vmem>>, vector<8x32xf32>
      tpu.vector_store %arg7[%c0_22, %c0_23], %28 {strides = array<i32>} : memref<8x32xf32, #tpu.memory_space<vmem>>, vector<8x32xf32>,
      %30 = vector.extract_strided_slice %27 {offsets = [0, 32], sizes = [8, 32], strides = [1, 1]} : vector<8x64xf32> to vector<8x32xf32>
      %c0_24 = arith.constant 0 : index
      %c0_25 = arith.constant 0 : index
      %31 = vector.load %arg8[%c0_24, %c0_25] : memref<8x32xf32, #tpu.memory_space<vmem>>, vector<8x32xf32>
      tpu.vector_store %arg8[%c0_24, %c0_25], %30 {strides = array<i32>} : memref<8x32xf32, #tpu.memory_space<vmem>>, vector<8x32xf32>,
    } else {
    }
    %c0 = arith.constant 0 : index
    %c0_1 = arith.constant 0 : index
    %c0_2 = arith.constant 0 : index
    %3 = vector.load %arg2[%c0, %c0_1, %c0_2] : memref<1x8x32xf32, #tpu.memory_space<vmem>>, vector<1x8x32xf32>
    %4 = vector.shape_cast %3 : vector<1x8x32xf32> to vector<8x32xf32>
    %c0_3 = arith.constant 0 : index
    %c0_4 = arith.constant 0 : index
    %5 = vector.load %arg4[%c0_3, %c0_4] : memref<32x32xf32, #tpu.memory_space<vmem>>, vector<32x32xf32>
    %cst = arith.constant dense<0.000000e+00> : vector<8x32xf32>
    %6 = tpu.matmul %4, %5, %cst {dimension_numbers = #tpu.dot_dimension_numbers<[1], [0], [0], [1], [0, 0, 1, 1], [], []>} : vector<8x32xf32>, vector<32x32xf32>, vector<8x32xf32> -> vector<8x32xf32>
    %c0_5 = arith.constant 0 : index
    %c0_6 = arith.constant 0 : index
    %7 = vector.load %arg7[%c0_5, %c0_6] : memref<8x32xf32, #tpu.memory_space<vmem>>, vector<8x32xf32>
    %cst_7 = arith.constant dense<0.000000e+00> : vector<8x8xf32>
    %8 = tpu.matmul %6, %7, %cst_7 {dimension_numbers = #tpu.dot_dimension_numbers<[1], [1], [0], [0], [0, 0, 1, 0], [], []>} : vector<8x32xf32>, vector<8x32xf32>, vector<8x8xf32> -> vector<8x8xf32>
    %cst_8 = arith.constant dense<0xFF800000> : vector<8xf32>
    %9 = vector.multi_reduction <maximumf>, %8, %cst_8 [1] : vector<8x8xf32> to vector<8xf32>
    %10 = vector.shape_cast %9 : vector<8xf32> to vector<8x1xf32>
    %11 = vector.broadcast %10 : vector<8x1xf32> to vector<8x8xf32>
    %12 = arith.subf %8, %11 : vector<8x8xf32>
    %13 = math.exp %12 : vector<8x8xf32>
    %cst_9 = arith.constant dense<0.000000e+00> : vector<8xf32>
    %14 = vector.multi_reduction <add>, %13, %cst_9 [1] : vector<8x8xf32> to vector<8xf32>
    %15 = vector.shape_cast %14 : vector<8xf32> to vector<8x1xf32>
    %16 = tpu.reciprocal %15 : vector<8x1xf32> -> vector<8x1xf32>
    %17 = vector.broadcast %16 : vector<8x1xf32> to vector<8x8xf32>
    %18 = arith.mulf %13, %17 : vector<8x8xf32>
    %c0_10 = arith.constant 0 : index
    %c0_11 = arith.constant 0 : index
    %19 = vector.load %arg8[%c0_10, %c0_11] : memref<8x32xf32, #tpu.memory_space<vmem>>, vector<8x32xf32>
    %cst_12 = arith.constant dense<0.000000e+00> : vector<8x32xf32>
    %20 = tpu.matmul %18, %19, %cst_12 {dimension_numbers = #tpu.dot_dimension_numbers<[1], [0], [0], [1], [0, 0, 1, 1], [], []>} : vector<8x8xf32>, vector<8x32xf32>, vector<8x32xf32> -> vector<8x32xf32>
    %c0_13 = arith.constant 0 : index
    %c0_14 = arith.constant 0 : index
    %c0_15 = arith.constant 0 : index
    %21 = vector.load %arg6[%c0_13, %c0_14, %c0_15] : memref<1x8x32xf32, #tpu.memory_space<vmem>>, vector<1x8x32xf32>
    %22 = vector.shape_cast %21 : vector<1x8x32xf32> to vector<8x32xf32>
    %23 = vector.shape_cast %20 : vector<8x32xf32> to vector<1x8x32xf32>
    tpu.vector_store %arg6[%c0_13, %c0_14, %c0_15], %23 {strides = array<i32>} : memref<1x8x32xf32, #tpu.memory_space<vmem>>, vector<1x8x32xf32>,
    return
  }
  func.func @transform_0(%arg0: i32, %arg1: i32) -> (i32, i32, i32) {
    %c0_i32 = arith.constant 0 : i32
    %c0_i32_0 = arith.constant 0 : i32
    return %arg0, %arg1, %c0_i32 : i32, i32, i32
  }
  func.func @transform_1(%arg0: i32, %arg1: i32) -> (i32, i32, i32) {
    %c0_i32 = arith.constant 0 : i32
    %c0_i32_0 = arith.constant 0 : i32
    %c0_i32_1 = arith.constant 0 : i32
    return %arg0, %c0_i32, %c0_i32_0 : i32, i32, i32
  }
  func.func @transform_2(%arg0: i32, %arg1: i32) -> (i32, i32) {
    %c0_i32 = arith.constant 0 : i32
    %c0_i32_0 = arith.constant 0 : i32
    %c0_i32_1 = arith.constant 0 : i32
    return %c0_i32, %c0_i32_0 : i32, i32
  }
  func.func @transform_3(%arg0: i32, %arg1: i32) -> (i32, i32) {
    %c0_i32 = arith.constant 0 : i32
    %c0_i32_0 = arith.constant 0 : i32
    %c0_i32_1 = arith.constant 0 : i32
    return %c0_i32, %c0_i32_0 : i32, i32
  }
  func.func @transform_4(%arg0: i32, %arg1: i32) -> (i32, i32, i32) {
    %c0_i32 = arith.constant 0 : i32
    %c0_i32_0 = arith.constant 0 : i32
    return %arg0, %arg1, %c0_i32 : i32, i32, i32
  }
}

</mosaic_0001>

<llo_original>
// kernel: tpu_custom_call.1
$region0: #{tpu_custom_call.1}
  #allocation0 [shape = 'u32[]', space=smem, size = 0x4, offset = 0x4, fixed_abs, tag = 'smem constant byte address 0x4 - core index']
  #allocation1 [shape = 'u32[72,128]{1,0:T(1,128)}', space=vmem, size = 0x9000, scoped, tag = 'internal scratch']
  #allocation2 [shape = 'f32[8,32]{1,0:T(8,128)}', space=vmem, size = 0x1000, scoped, tag = 'scratch operand']
  #allocation3 [shape = 'f32[8,32]{1,0:T(8,128)}', space=vmem, size = 0x1000, scoped, tag = 'scratch operand']
  %s0 = inlined_call_operand.hbm [shape: f32[2,8,32], index: 0, kind: input, shape index: {}]
  %s1 = inlined_call_operand.hbm [shape: f32[2,8,32], index: 1, kind: input, shape index: {}]
  %s2 = inlined_call_operand.hbm [shape: f32[32,32], index: 2, kind: input, shape index: {}]
  %s3 = inlined_call_operand.hbm [shape: f32[32,64], index: 3, kind: input, shape index: {}]
  %s4 = inlined_call_operand.hbm [shape: f32[2,8,32], index: 4, kind: output, shape index: {}]
  %s5 = sld [smem:[#allocation0]]
  $region69: #{tpu_custom_call.1} parent=0
    _
  %s7 = ssub.s32 1, %s5
  %s8 = scalar_select 0, %s7, %s5
  $region1: #{tpu_custom_call.1} parent=0
    #allocation4 [shape = 'u8[8192]{0}', space=vmem, size = 0x2000, scoped, tag = 'input window, operand 0']
    #allocation5 [shape = 's32[2]{0}', space=sflag, size = 0x8, scoped, tag = 'scoped memory for tpu_custom_call.1']
    #allocation6 [shape = 's32[2]{0}', space=sflag, size = 0x8, scoped, tag = 'scoped memory for tpu_custom_call.1']
    #allocation7 [shape = 'u8[8192]{0}', space=vmem, size = 0x2000, scoped, tag = 'input window, operand 1']
    #allocation8 [shape = 's32[2]{0}', space=sflag, size = 0x8, scoped, tag = 'scoped memory for tpu_custom_call.1']
    #allocation9 [shape = 'u8[16384]{0}', space=vmem, size = 0x4000, scoped, tag = 'input window, operand 2, single buffered']
    #allocation10 [shape = 'u8[16384]{0}', space=vmem, size = 0x4000, scoped, tag = 'input window, operand 3, single buffered']
    #allocation11 [shape = 's32[1]{0}', space=sflag, size = 0x4, scoped, tag = 'scoped memory for tpu_custom_call.1']
    #allocation12 [shape = 'u8[8192]{0}', space=vmem, size = 0x2000, scoped, tag = 'output window, operand 0']
    %9 = vsyncpa [#allocation5], 0
    %s10 = scalar_lea.sflag [#allocation5], 1
    %11 = vsyncpa %s10, 0
    %12 = vsyncpa [#allocation8], 0
    %s13 = scalar_lea.sflag [#allocation8], 1
    %14 = vsyncpa %s13, 0
    %15 = vsyncpa [#allocation11], 0
    %16 = vsyncpa [#allocation6], 0
    %s17 = scalar_lea.sflag [#allocation6], 1
    %18 = vsyncpa %s17, 0
    loop: start=0, step=1, limit=4
    $region2: #{tpu_custom_call.1} parent=1 // loop_pre_header
      _
    $region3: #{tpu_custom_call.1} parent=1 // loop_header
      %s20 = sphi 0, %s24
      %p21 = scmp.ge.s32.totalorder %s20, 4
      %s27 = sphi 0, %s39
      %s28 = sphi 0, %s35
      %s29 = sphi 0, %s27
      %s30 = sphi 0, %s28
      %s31 = sphi 0, %s29
      %s32 = sphi 0, %s30
      %s44 = sphi 0, %s46
      %s47 = sphi 0, %s44
      %s48 = sphi 0, %s47
      %s64 = sphi 0, %s48
      %s70 = sphi 0, %s72
      %s73 = sphi 0, %s70
      %s74 = sphi 0, %s73
      %s90 = sphi 0, %s74
      %s94 = sphi 0, %s94
      %s96 = sphi 0, %s94
      %s97 = sphi 0, %s96
      %s111 = sphi 0, %s97
      %s115 = sphi 0, %s115
      %s117 = sphi 0, %s115
      %s118 = sphi 0, %s117
      %s132 = sphi 0, %s118
      %s140 = sphi 0, %s142
      %s143 = sphi 0, %s140
      %s144 = sphi 0, %s143
      %s160 = sphi 0, %s144
    $region4: #{tpu_custom_call.1} parent=1 // loop_header_branch
      %23 = sbr.rel (%p21) target = $region8
    $region5: #{tpu_custom_call.1} parent=1 // loop_body
      %s25 = ssub.s32 %s20, 1
      %s26 = ssub.s32 %s20, 2
      %s33 = sadd.s32 1, %s28
      %p34 = scmp.ge.s32.totalorder %s33, 1
      %s35 = scalar_select %p34, 0, %s33
      %s36 = sadd.s32 1, %s27
      %s37 = scalar_select %p34, %s36, %s27
      %p38 = scmp.ge.s32.totalorder %s37, 2
      %s39 = scalar_select %p38, 0, %s37
      %s40 = ssub.s32 %s27, %s39
      %s41 = ssub.s32 %s28, %s35
      %s42 = sor.u32 %s40, %s41
      %p43 = scmp.eq.s32.totalorder %s42, 0
      %s45 = sadd.s32 %s44, 1
      %s46 = scalar_select %p43, %s44, %s45
      %p49 = pneg %p43
      %p50 = scmp.eq.s32.totalorder %s20, 1
      %p51 = por %p49, %p50
      %p52 = scmp.ne.s32.totalorder %s44, %s47
      %p53 = scmp.eq.s32.totalorder %s20, 0
      %p54 = por %p52, %p53
      %p55 = scmp.ne.s32.totalorder %s44, %s47
      %p56 = scmp.eq.s32.totalorder %s25, 1
      %p57 = por %p55, %p56
      %p58 = scmp.ne.s32.totalorder %s47, %s48
      %p59 = scmp.eq.s32.totalorder %s25, 0
      %p60 = por %p58, %p59
      %p61 = scmp.ne.s32.totalorder %s47, %s48
      %p62 = scmp.eq.s32.totalorder %s26, 1
      %p63 = por %p61, %p62
      %p65 = scmp.ne.s32.totalorder %s48, %s64
      %p66 = scmp.eq.s32.totalorder %s26, 0
      %p67 = por %p65, %p66
      %s68 = ssub.s32 %s27, %s39
      %p69 = scmp.eq.s32.totalorder %s68, 0
      %s71 = sadd.s32 %s70, 1
      %s72 = scalar_select %p69, %s70, %s71
      %p75 = pneg %p69
      %p76 = scmp.eq.s32.totalorder %s20, 1
      %p77 = por %p75, %p76
      %p78 = scmp.ne.s32.totalorder %s70, %s73
      %p79 = scmp.eq.s32.totalorder %s20, 0
      %p80 = por %p78, %p79
      %p81 = scmp.ne.s32.totalorder %s70, %s73
      %p82 = scmp.eq.s32.totalorder %s25, 1
      %p83 = por %p81, %p82
      %p84 = scmp.ne.s32.totalorder %s73, %s74
      %p85 = scmp.eq.s32.totalorder %s25, 0
      %p86 = por %p84, %p85
      %p87 = scmp.ne.s32.totalorder %s73, %s74
      %p88 = scmp.eq.s32.totalorder %s26, 1
      %p89 = por %p87, %p88
      %p91 = scmp.ne.s32.totalorder %s74, %s90
      %p92 = scmp.eq.s32.totalorder %s26, 0
      %p93 = por %p91, %p92
      %s95 = sadd.s32 %s94, 1
      %p98 = scmp.eq.s32.totalorder %s20, 1
      %p99 = scmp.ne.s32.totalorder %s94, %s96
      %p100 = scmp.eq.s32.totalorder %s20, 0
      %p101 = por %p99, %p100
      %p102 = scmp.ne.s32.totalorder %s94, %s96
      %p103 = scmp.eq.s32.totalorder %s25, 1
      %p104 = por %p102, %p103
      %p105 = scmp.ne.s32.totalorder %s96, %s97
      %p106 = scmp.eq.s32.totalorder %s25, 0
      %p107 = por %p105, %p106
      %p108 = scmp.ne.s32.totalorder %s96, %s97
      %p109 = scmp.eq.s32.totalorder %s26, 1
      %p110 = por %p108, %p109
      %p112 = scmp.ne.s32.totalorder %s97, %s111
      %p113 = scmp.eq.s32.totalorder %s26, 0
      %p114 = por %p112, %p113
      %s116 = sadd.s32 %s115, 1
      %p119 = scmp.eq.s32.totalorder %s20, 1
      %p120 = scmp.ne.s32.totalorder %s115, %s117
      %p121 = scmp.eq.s32.totalorder %s20, 0
      %p122 = por %p120, %p121
      %p123 = scmp.ne.s32.totalorder %s115, %s117
      %p124 = scmp.eq.s32.totalorder %s25, 1
      %p125 = por %p123, %p124
      %p126 = scmp.ne.s32.totalorder %s117, %s118
      %p127 = scmp.eq.s32.totalorder %s25, 0
      %p128 = por %p126, %p127
      %p129 = scmp.ne.s32.totalorder %s117, %s118
      %p130 = scmp.eq.s32.totalorder %s26, 1
      %p131 = por %p129, %p130
      %p133 = scmp.ne.s32.totalorder %s118, %s132
      %p134 = scmp.eq.s32.totalorder %s26, 0
      %p135 = por %p133, %p134
      %s136 = ssub.s32 %s27, %s39
      %s137 = ssub.s32 %s28, %s35
      %s138 = sor.u32 %s136, %s137
      %p139 = scmp.eq.s32.totalorder %s138, 0
      %s141 = sadd.s32 %s140, 1
      %s142 = scalar_select %p139, %s140, %s141
      %p145 = pneg %p139
      %p146 = scmp.eq.s32.totalorder %s20, 1
      %p147 = por %p145, %p146
      %p148 = scmp.ne.s32.totalorder %s140, %s143
      %p149 = scmp.eq.s32.totalorder %s20, 0
      %p150 = por %p148, %p149
      %p151 = scmp.ne.s32.totalorder %s140, %s143
      %p152 = scmp.eq.s32.totalorder %s25, 1
      %p153 = por %p151, %p152
      %p154 = scmp.ne.s32.totalorder %s143, %s144
      %p155 = scmp.eq.s32.totalorder %s25, 0
      %p156 = por %p154, %p155
      %p157 = scmp.ne.s32.totalorder %s143, %s144
      %p158 = scmp.eq.s32.totalorder %s26, 1
      %p159 = por %p157, %p158
      %p161 = scmp.ne.s32.totalorder %s144, %s160
      %p162 = scmp.eq.s32.totalorder %s26, 0
      %p163 = por %p161, %p162
      %p164 = scmp.le.s32.totalorder 1, %s20
      %p165 = scmp.lt.s32.totalorder %s20, 3
      %p166 = pnand %p164, %p165
      %p167 = pneg %p166
      // Predicated region
      $region9: #{tpu_custom_call.1} parent=5 // pred_check
        _
      $region10: #{tpu_custom_call.1} parent=5 // pred_check_branch
        %169 = sbr.rel (%p166) target = $region12
      $region11: #{tpu_custom_call.1} parent=5 // pred_region
        %s170 = ssub.s32 %s20, 1
        // Predicated region
        $region13: #{tpu_custom_call.1} parent=11 // pred_check
          %p171 = pneg %p107
        $region14: #{tpu_custom_call.1} parent=11 // pred_check_branch
          %173 = sbr.rel (%p171) target = $region16
        $region15: #{tpu_custom_call.1} parent=11 // pred_region
          %175 = vsyncadd [#allocation8], 0
          %s176 = sshll.u32 %s2, 4
          %s177 = int_to_ptr.hbm [resolvable:$true] %s176
          %s178 = sshll.u32 [#allocation9], 4
          %s179 = int_to_ptr.vmem [resolvable:$true] %s178
          %184 = dma.hbm_to_vmem [thread:$0]  %s177, 512, %s179, [#allocation8], 128, 128, 8
        $region16: #{tpu_custom_call.1} parent=11 // pred_fallthru
          _
        // Predicated region
        $region17: #{tpu_custom_call.1} parent=11 // pred_check
          %p185 = pneg %p128
        $region18: #{tpu_custom_call.1} parent=11 // pred_check_branch
          %187 = sbr.rel (%p185) target = $region20
        $region19: #{tpu_custom_call.1} parent=11 // pred_region
          %189 = vsyncadd [#allocation11], 0
          %s190 = sshll.u32 %s3, 4
          %s191 = int_to_ptr.hbm [resolvable:$true] %s190
          %s192 = sshll.u32 [#allocation10], 4
          %s193 = int_to_ptr.vmem [resolvable:$true] %s192
          %198 = dma.hbm_to_vmem [thread:$0]  %s191, 512, %s193, [#allocation11], 128, 128, 8
        $region20: #{tpu_custom_call.1} parent=11 // pred_fallthru
          _
      $region12: #{tpu_custom_call.1} parent=5 // pred_fallthru
        _
      %p199 = scmp.lt.s32.totalorder %s20, 2
      // Predicated region
      $region21: #{tpu_custom_call.1} parent=5 // pred_check
        %p200 = pneg %p199
      $region22: #{tpu_custom_call.1} parent=5 // pred_check_branch
        %202 = sbr.rel (%p200) target = $region24
      $region23: #{tpu_custom_call.1} parent=5 // pred_region
        // Predicated region
        $region25: #{tpu_custom_call.1} parent=23 // pred_check
          %p203 = pneg %p54
        $region26: #{tpu_custom_call.1} parent=23 // pred_check_branch
          %205 = sbr.rel (%p203) target = $region28
        $region27: #{tpu_custom_call.1} parent=23 // pred_region
          %s206 = sand.u32 %s44, 1
          %s207 = scalar_lea.sflag [#allocation5], %s206
          %s208 = sand.u32 %s44, 1
          %s209 = smul.addr %s208, 8
          %s210 = scalar_lea.vmem [#allocation4], %s209
          %212 = vsyncadd %s207, 0
          %s213 = sadd.s32 %s28, %s27
          %s214 = smul.addr %s213, 8
          %s215 = scalar_lea.hbm %s0, %s214
          %s217 = sshll.u32 %s215, 4
          %s218 = int_to_ptr.hbm [resolvable:$true] %s217
          %s219 = sshll.u32 %s210, 4
          %s220 = int_to_ptr.vmem [resolvable:$true] %s219
          %222 = dma.hbm_to_vmem [thread:$0]  %s218, 128, %s220, %s207
        $region28: #{tpu_custom_call.1} parent=23 // pred_fallthru
          _
        // Predicated region
        $region29: #{tpu_custom_call.1} parent=23 // pred_check
          %p223 = pneg %p80
        $region30: #{tpu_custom_call.1} parent=23 // pred_check_branch
          %225 = sbr.rel (%p223) target = $region32
        $region31: #{tpu_custom_call.1} parent=23 // pred_region
          %s226 = sand.u32 %s20, 1
          %s227 = scalar_lea.sflag [#allocation8], %s226
          %s228 = sand.u32 %s70, 1
          %s229 = smul.addr %s228, 8
          %s230 = scalar_lea.vmem [#allocation7], %s229
          %232 = vsyncadd %s227, 0
          %s233 = smul.addr %s27, 8
          %s234 = scalar_lea.hbm %s1, %s233
          %s236 = sshll.u32 %s234, 4
          %s237 = int_to_ptr.hbm [resolvable:$true] %s236
          %s238 = sshll.u32 %s230, 4
          %s239 = int_to_ptr.vmem [resolvable:$true] %s238
          %241 = dma.hbm_to_vmem [thread:$0]  %s237, 128, %s239, %s227
        $region32: #{tpu_custom_call.1} parent=23 // pred_fallthru
          _
      $region24: #{tpu_custom_call.1} parent=5 // pred_fallthru
        _
      %p242 = scmp.le.s32.totalorder 1, %s20
      %p243 = scmp.lt.s32.totalorder %s20, 3
      %p244 = pnand %p242, %p243
      %p245 = pneg %p244
      // Predicated region
      $region33: #{tpu_custom_call.1} parent=5 // pred_check
        _
      $region34: #{tpu_custom_call.1} parent=5 // pred_check_branch
        %247 = sbr.rel (%p244) target = $region36
      $region35: #{tpu_custom_call.1} parent=5 // pred_region
        %s248 = ssub.s32 %s20, 1
        %s249 = sand.u32 %s47, 1
        %s250 = scalar_lea.sflag [#allocation5], %s249
        %s251 = sand.u32 %s47, 1
        %s252 = smul.addr %s251, 8
        %s253 = scalar_lea.vmem [#allocation4], %s252
        // Predicated region
        $region37: #{tpu_custom_call.1} parent=35 // pred_check
          %p254 = pneg %p60
        $region38: #{tpu_custom_call.1} parent=35 // pred_check_branch
          %256 = sbr.rel (%p254) target = $region40
        $region39: #{tpu_custom_call.1} parent=35 // pred_region
          %258 = dma.done %s250, 128
        $region40: #{tpu_custom_call.1} parent=35 // pred_fallthru
          _
        %s259 = sand.u32 %s25, 1
        %s260 = scalar_lea.sflag [#allocation8], %s259
        %s261 = sand.u32 %s73, 1
        %s262 = smul.addr %s261, 8
        %s263 = scalar_lea.vmem [#allocation7], %s262
        // Predicated region
        $region41: #{tpu_custom_call.1} parent=35 // pred_check
          %p264 = pneg %p86
        $region42: #{tpu_custom_call.1} parent=35 // pred_check_branch
          %266 = sbr.rel (%p264) target = $region44
        $region43: #{tpu_custom_call.1} parent=35 // pred_region
          %268 = dma.done %s260, 128
        $region44: #{tpu_custom_call.1} parent=35 // pred_fallthru
          _
        // Predicated region
        $region45: #{tpu_custom_call.1} parent=35 // pred_check
          %p269 = pneg %p107
        $region46: #{tpu_custom_call.1} parent=35 // pred_check_branch
          %271 = sbr.rel (%p269) target = $region48
        $region47: #{tpu_custom_call.1} parent=35 // pred_region
          %273 = dma.done [#allocation8], 512
        $region48: #{tpu_custom_call.1} parent=35 // pred_fallthru
          _
        // Predicated region
        $region49: #{tpu_custom_call.1} parent=35 // pred_check
          %p274 = pneg %p128
        $region50: #{tpu_custom_call.1} parent=35 // pred_check_branch
          %276 = sbr.rel (%p274) target = $region52
        $region51: #{tpu_custom_call.1} parent=35 // pred_region
          %278 = dma.done [#allocation11], 512
        $region52: #{tpu_custom_call.1} parent=35 // pred_fallthru
          _
        %s279 = sand.u32 %s47, 1
        %s280 = scalar_lea.sflag [#allocation5], %s279
        %s281 = sand.u32 %s47, 1
        %s282 = smul.addr %s281, 8
        %s283 = scalar_lea.vmem [#allocation4], %s282
        %p284 = pneg %p60
        %p285 = pneg %p57
        %s286 = sand.u32 %s25, 1
        %s287 = scalar_lea.sflag [#allocation8], %s286
        %s288 = sand.u32 %s73, 1
        %s289 = smul.addr %s288, 8
        %s290 = scalar_lea.vmem [#allocation7], %s289
        %p291 = pneg %p86
        %p292 = pneg %p83
        %p293 = pneg %p107
        %p294 = pneg %p104
        %p295 = pneg %p128
        %p296 = pneg %p125
        %p297 = pneg %p156
        %p298 = pneg %p153
        %s299 = sand.u32 %s143, 1
        %s300 = scalar_lea.sflag [#allocation6], %s299
        %s301 = sand.u32 %s143, 1
        %s302 = smul.addr %s301, 8
        %s303 = scalar_lea.vmem [#allocation12], %s302
        %p304 = scmp.eq.s32.totalorder %s30, 0
        // Predicated region
        $region53: #{tpu_custom_call.1} parent=35 // pred_check
          %p305 = pneg %p304
        $region54: #{tpu_custom_call.1} parent=35 // pred_check_branch
          %307 = sbr.rel (%p305) target = $region56
        $region55: #{tpu_custom_call.1} parent=35 // pred_region
          %v308 = vld [vmem:[%s263] sm:$0xff]
          %v309 = vld [vmem:[#allocation10] sm:$0xff]
          %v310 = vld [vmem:[#allocation10 + $0x8] sm:$0xff]
          %v311 = vld [vmem:[#allocation10 + $0x10] sm:$0xff]
          %v312 = vld [vmem:[#allocation10 + $0x18] sm:$0xff]
          %vm313 = vcmask 261120
          %v315 = vsel %vm313, %v308, 0
          %317 = vmatpush.msra.mxu0 0.0
          %318 = vmatpush.msra.mxu0 0.0
          %319 = vmatpush.msra.mxu0 0.0
          %320 = vmatpush.msra.mxu0 0.0
          %321 = vmatpush.msra.mxu0 0.0
          %322 = vmatpush.msra.mxu0 0.0
          %323 = vmatpush.msra.mxu0 0.0
          %324 = vmatpush.msra.mxu0 0.0
          %325 = vmatpush.msra.mxu0 0.0
          %326 = vmatpush.msra.mxu0 0.0
          %327 = vmatpush.msra.mxu0 0.0
          %328 = vmatpush.msra.mxu0 0.0
          %329 = vmatpush.msra.mxu0 %v312
          %330 = vmatpush.msra.mxu0 %v311
          %331 = vmatpush.msra.mxu0 %v310
          %332 = vmatpush.msra.mxu0 %v309
          %333 = vmatmul.f32.gmra.mxu0 %v315
          %v334 = vpop.f32.mrf.mxu0
          %v335 = vadd.f32 0.0, %v334
          %336 = vdwg.mxu0
          %337 = vst.msk [vmem:[#allocation2] sm:$0xff] %vm313, %v335
          %339 = vrot.lane.b32.xlu0 %v335, 96
          %v340 = vpop.permute.xlu0 %339
          %342 = vst.msk [vmem:[#allocation3] sm:$0xff] %vm313, %v340
        $region56: #{tpu_custom_call.1} parent=35 // pred_fallthru
          _
        %v343 = vld [vmem:[%s253] sm:$0xff]
        %v344 = vld [vmem:[#allocation9] sm:$0xff]
        %v345 = vld [vmem:[#allocation9 + $0x8] sm:$0xff]
        %v346 = vld [vmem:[#allocation9 + $0x10] sm:$0xff]
        %v347 = vld [vmem:[#allocation9 + $0x18] sm:$0xff]
        %vm348 = vcmask 261120
        %v350 = vsel %vm348, %v343, 0
        %352 = vmatpush.msra.mxu0 0.0
        %353 = vmatpush.msra.mxu0 0.0
        %354 = vmatpush.msra.mxu0 0.0
        %355 = vmatpush.msra.mxu0 0.0
        %356 = vmatpush.msra.mxu0 0.0
        %357 = vmatpush.msra.mxu0 0.0
        %358 = vmatpush.msra.mxu0 0.0
        %359 = vmatpush.msra.mxu0 0.0
        %360 = vmatpush.msra.mxu0 0.0
        %361 = vmatpush.msra.mxu0 0.0
        %362 = vmatpush.msra.mxu0 0.0
        %363 = vmatpush.msra.mxu0 0.0
        %364 = vmatpush.msra.mxu0 %v347
        %365 = vmatpush.msra.mxu0 %v346
        %366 = vmatpush.msra.mxu0 %v345
        %367 = vmatpush.msra.mxu0 %v344
        %368 = vmatmul.f32.gmra.mxu0 %v350
        %v369 = vpop.f32.mrf.mxu0
        %v370 = vadd.f32 0.0, %v369
        %371 = vdwg.mxu0
        %v372 = vld [vmem:[#allocation2] sm:$0xff]
        %v374 = vsel %vm348, %v370, 0
        %v377 = vsel %vm348, %v372, 0
        %379 = vmatpush.xpose.msra.mxu0 0.0
        %380 = vmatpush.xpose.msra.mxu0 0.0
        %381 = vmatpush.xpose.msra.mxu0 0.0
        %382 = vmatpush.xpose.msra.mxu0 0.0
        %383 = vmatpush.xpose.msra.mxu0 0.0
        %384 = vmatpush.xpose.msra.mxu0 0.0
        %385 = vmatpush.xpose.msra.mxu0 0.0
        %386 = vmatpush.xpose.msra.mxu0 0.0
        %387 = vmatpush.xpose.msra.mxu0 0.0
        %388 = vmatpush.xpose.msra.mxu0 0.0
        %389 = vmatpush.xpose.msra.mxu0 0.0
        %390 = vmatpush.xpose.msra.mxu0 0.0
        %391 = vmatpush.xpose.msra.mxu0 0.0
        %392 = vmatpush.xpose.msra.mxu0 0.0
        %393 = vmatpush.xpose.msra.mxu0 0.0
        %394 = vmatpush.xpose.msra.mxu0 %v377
        %395 = vmatmul.f32.gmra.mxu0 %v374
        %v396 = vpop.f32.mrf.mxu0
        %v397 = vadd.f32 0.0, %v396
        %398 = vdwg.mxu0
        %vm399 = vcmask 64512
        %v400 = vsel %vm399, %v397, -inf
        %401 = vmax.xlane.f32.xlu0 %v400
        %v402 = vpop.xlane.xlu0 %401
        %v403 = vsub.f32 %v397, %v402
        %v404 = vmul.f32 %v403, 1.442695
        %v405 = vpow.pop %v404
        %v406 = vsel %vm399, %v405, 0.0
        %407 = vadd.xlane.f32.xlu0 %v406
        %v408 = vpop.xlane.xlu0 %407
        %v409 = vrcp.pop %v408
        %v410 = vmul.f32 %v408, %v409
        %v411 = vsub.f32 1.0, %v410
        %v412 = vmul.f32 %v409, %v411
        %v413 = vadd.f32 %v409, %v412
        %vm414 = vweird.f32 %v408
        %vm415 = vweird.f32 %v409
        %vm416 = vmor %vm414, %vm415
        %v417 = vsel %vm416, %v409, %v413
        %v418 = vand.u32 2147483647, %v408
        %vm419 = vcmp.eq.f32.partialorder %v418, 8.507059e+37
        %v420 = vand.u32 %v408, 2147483648
        %v421 = vor.u32 1.1754944e-38, %v420
        %v422 = vsel %vm419, %v421, %v417
        %v423 = vmul.f32 %v405, %v422
        %v424 = vld [vmem:[#allocation3] sm:$0xff]
        %v426 = vsel %vm399, %v423, 0
        %428 = vmatpush.msra.mxu0 0.0
        %429 = vmatpush.msra.mxu0 0.0
        %430 = vmatpush.msra.mxu0 0.0
        %431 = vmatpush.msra.mxu0 0.0
        %432 = vmatpush.msra.mxu0 0.0
        %433 = vmatpush.msra.mxu0 0.0
        %434 = vmatpush.msra.mxu0 0.0
        %435 = vmatpush.msra.mxu0 0.0
        %436 = vmatpush.msra.mxu0 0.0
        %437 = vmatpush.msra.mxu0 0.0
        %438 = vmatpush.msra.mxu0 0.0
        %439 = vmatpush.msra.mxu0 0.0
        %440 = vmatpush.msra.mxu0 0.0
        %441 = vmatpush.msra.mxu0 0.0
        %442 = vmatpush.msra.mxu0 0.0
        %443 = vmatpush.msra.mxu0 %v424
        %444 = vmatmul.f32.gmra.mxu0 %v426
        %v445 = vpop.f32.mrf.mxu0
        %v446 = vadd.f32 0.0, %v445
        %447 = vdwg.mxu0
        %448 = vst.msk [vmem:[%s303] sm:$0xff] %vm348, %v446
        %s449 = sand.u32 %s143, 1
        %s450 = scalar_lea.sflag [#allocation6], %s449
        %s451 = sand.u32 %s143, 1
        %s452 = smul.addr %s451, 8
        %s453 = scalar_lea.vmem [#allocation12], %s452
        // Predicated region
        $region57: #{tpu_custom_call.1} parent=35 // pred_check
          %p454 = pneg %p153
        $region58: #{tpu_custom_call.1} parent=35 // pred_check_branch
          %456 = sbr.rel (%p454) target = $region60
        $region59: #{tpu_custom_call.1} parent=35 // pred_region
          %458 = vsyncadd %s450, 0
          %s459 = sadd.s32 %s30, %s29
          %s460 = smul.addr %s459, 8
          %s461 = scalar_lea.hbm %s4, %s460
          %s463 = sshll.u32 %s453, 4
          %s464 = int_to_ptr.vmem [resolvable:$true] %s463
          %s465 = sshll.u32 %s461, 4
          %s466 = int_to_ptr.hbm [resolvable:$true] %s465
          %468 = dma.vmem_to_hbm [thread:$0]  %s464, 128, %s466, %s450
        $region60: #{tpu_custom_call.1} parent=35 // pred_fallthru
          _
      $region36: #{tpu_custom_call.1} parent=5 // pred_fallthru
        _
      %p469 = scmp.le.s32.totalorder 2, %s20
      // Predicated region
      $region61: #{tpu_custom_call.1} parent=5 // pred_check
        %p470 = pneg %p469
      $region62: #{tpu_custom_call.1} parent=5 // pred_check_branch
        %472 = sbr.rel (%p470) target = $region64
      $region63: #{tpu_custom_call.1} parent=5 // pred_region
        %s473 = ssub.s32 %s20, 2
        // Predicated region
        $region65: #{tpu_custom_call.1} parent=63 // pred_check
          %p474 = pneg %p159
        $region66: #{tpu_custom_call.1} parent=63 // pred_check_branch
          %476 = sbr.rel (%p474) target = $region68
        $region67: #{tpu_custom_call.1} parent=63 // pred_region
          %s477 = sand.u32 %s144, 1
          %s478 = scalar_lea.sflag [#allocation6], %s477
          %s479 = sand.u32 %s144, 1
          %s480 = smul.addr %s479, 8
          %s481 = scalar_lea.vmem [#allocation12], %s480
          %483 = dma.done %s478, 128
        $region68: #{tpu_custom_call.1} parent=63 // pred_fallthru
          _
      $region64: #{tpu_custom_call.1} parent=5 // pred_fallthru
        _
    $region6: #{tpu_custom_call.1} parent=1 // loop_footer
      %s24 = sadd.s32 1, %s20
    $region7: #{tpu_custom_call.1} parent=1 // loop_footer_branch
      %19 = sbr.rel target = $region3
    $region8: #{tpu_custom_call.1} parent=1 // loop_exit
      _
    %484 = vsyncpa [#allocation5], 1
    %s485 = scalar_lea.sflag [#allocation5], 1
    %486 = vsyncpa %s485, 1
    %487 = vsyncpa [#allocation8], 1
    %s488 = scalar_lea.sflag [#allocation8], 1
    %489 = vsyncpa %s488, 1
    %490 = vsyncpa [#allocation11], 1
    %491 = vsyncpa [#allocation6], 1
    %s492 = scalar_lea.sflag [#allocation6], 1
    %493 = vsyncpa %s492, 1

</llo_original>
